<compile_context>
chip_gen: v7x
topology: tpu7x:2x2x1
jax: 0.10.0
libtpu: 0.0.40
codegen_flags: <defaults>
</compile_context>

<pallas_src>
import functools

import jax
import jax.numpy as jnp
from jax.experimental import pallas as pl
from jax.experimental.pallas import tpu as pltpu

# Tile sizes (multiples of (8, 128)).  128x128 keeps per-step VMEM well under
# the v7x 64 MiB / 32 MiB-scoped budget; raise for large graphs on v5e/v6e.
TILE_N = 128
TILE_K = 128


def _round_up(x, m):
    return (x + m - 1) // m * m


# --------------------------- projection kernel ------------------------------

def _proj_kernel(x_ref, w_ref, out_ref):
    out_ref[...] = jnp.dot(
        x_ref[...], w_ref[...], preferred_element_type=jnp.float32
    ).astype(out_ref.dtype)


def project(x, w):
    """x: (Np, F_in) @ w: (F_in, F_out) -> (Np, F_out).  Np % TILE_N == 0."""
    n, f_in = x.shape
    f_out = w.shape[1]
    return pl.pallas_call(
        _proj_kernel,
        out_shape=jax.ShapeDtypeStruct((n, f_out), jnp.float32),
        grid_spec=pltpu.PrefetchScalarGridSpec(
            num_scalar_prefetch=0,
            grid=(n // TILE_N,),
            in_specs=[
                pl.BlockSpec((TILE_N, f_in), lambda i: (i, 0)),
                pl.BlockSpec((f_in, f_out), lambda i: (0, 0)),  # W resident
            ],
            out_specs=pl.BlockSpec((TILE_N, f_out), lambda i: (i, 0)),
        ),
        compiler_params=pltpu.CompilerParams(
            dimension_semantics=("parallel",)),
    )(x, w)


# --------------------------- attention kernel -------------------------------

def _attention_kernel(counts_ref, h_row_ref, h_col_ref, a_ref, adj_ref,
                      out_ref, acc_ref, rowsum_ref, *,
                      nheads, fph, alpha, final, valid_cols):
    """Streaming multi-head sparse GAT attention.

    counts_ref : SMEM (nI, nK) int32  -- nnz per adjacency tile (skip zeros)
    h_row_ref  : (TILE_N, nheads*fph) projected features, row tile
    h_col_ref  : (TILE_K, nheads*fph) projected features, column tile
    a_ref      : (nheads, 2, fph)     attention vectors (src row, dst row)
    adj_ref    : (TILE_N, TILE_K)     int8 adjacency tile
    out_ref    : (TILE_N, nheads*fph)
    acc_ref    : VMEM scratch (TILE_N, nheads*fph) f32
    rowsum_ref : VMEM scratch (TILE_N, nheads)     f32
    """
    i = pl.program_id(0)
    k = pl.program_id(1)

    @pl.when(k == 0)
    def _init():
        acc_ref[...] = jnp.zeros_like(acc_ref)
        rowsum_ref[...] = jnp.zeros_like(rowsum_ref)

    @pl.when(counts_ref[i, k] > 0)
    def _compute():
        # Mask before exp: unmasked entries never produce inf.
        mask = adj_ref[...].astype(jnp.float32) != 0.0        # (TILE_N, TILE_K)
        h_row = h_row_ref[...]
        h_col = h_col_ref[...]
        h_col_bf = h_col.astype(jnp.bfloat16)

        dims = (((1,), (1,)), ((), ()))                        # last-last contraction
        partials = []
        rowsums = []
        for hd in range(nheads):                               # static unroll
            sl = slice(hd * fph, (hd + 1) * fph)
            h_i = h_row[:, sl]                                 # (TILE_N, fph)
            h_j = h_col[:, sl]                                 # (TILE_K, fph)
            a_hd = a_ref[hd]                                   # (2, fph)
            a_src = a_hd[0:1, :]
            a_dst = a_hd[1:2, :]
            # MXU: s_ij = a_src.h_i + a_dst.h_j
            f_i = jax.lax.dot_general(h_i, a_src, dims,
                                      preferred_element_type=jnp.float32)   # (TILE_N, 1)
            f_jT = jax.lax.dot_general(a_dst, h_j, dims,
                                       preferred_element_type=jnp.float32)  # (1, TILE_K)
            s = f_i + f_jT                                     # (TILE_N, TILE_K)
            neg = jnp.where(s > 0, -s, (-alpha) * s)           # -leakyrelu(s)
            e = jnp.exp(jnp.where(mask, neg, -jnp.inf))        # masked edge weights
            rowsums.append(jnp.sum(e, axis=1, keepdims=True))
            partials.append(jnp.dot(e.astype(jnp.bfloat16), h_col_bf[:, sl],
                                    preferred_element_type=jnp.float32))
        acc_ref[...] += jnp.concatenate(partials, axis=1)
        rowsum_ref[...] += jnp.concatenate(rowsums, axis=1)

    @pl.when(k == pl.num_programs(1) - 1)
    def _finalize():
        # Guarded reciprocal: isolated / padded nodes (rowsum == 0) -> output 0.
        inv = pl.reciprocal(jnp.maximum(rowsum_ref[...], 1e-30), approx=True)
        cols = []
        for hd in range(nheads):
            cols.append(acc_ref[:, hd * fph:(hd + 1) * fph] * inv[:, hd:hd + 1])
        res = jnp.concatenate(cols, axis=1)                    # (TILE_N, nheads*fph)
        # ELU: hidden heads (in-layer F.elu) / output layer (SpGAT's F.elu).
        res = jnp.where(res > 0, res, jnp.exp(jnp.minimum(res, 0.0)) - 1.0)
        if final:
            # log_softmax over the first `valid_cols` (real classes) only.
            col_id = jax.lax.broadcasted_iota(jnp.int32, res.shape, 1)
            valid = col_id < valid_cols
            masked = jnp.where(valid, res, -jnp.inf)
            m = jnp.max(masked, axis=1, keepdims=True)
            z = masked - m
            lse = jnp.log(jnp.sum(jnp.exp(z), axis=1, keepdims=True))
            res = jnp.where(valid, z - lse, 0.0)
        out_ref[...] = res.astype(out_ref.dtype)


def sp_attention(h, adj_i8, a_stack, *, nheads, fph, alpha, final, valid_cols):
    """h: (Np, nheads*fph), adj_i8: (Np, Np) int8, a_stack: (nheads, 2, fph)."""
    n = h.shape[0]
    hid = nheads * fph
    n_i = n // TILE_N
    n_k = n // TILE_K
    # Per-tile nonzero counts (cheap XLA pre-pass) -> SMEM scalar prefetch.
    counts = adj_i8.astype(jnp.int32).reshape(
        n_i, TILE_N, n_k, TILE_K).sum(axis=(1, 3))

    kernel = functools.partial(
        _attention_kernel, nheads=nheads, fph=fph, alpha=alpha,
        final=final, valid_cols=valid_cols)

    return pl.pallas_call(
        kernel,
        out_shape=jax.ShapeDtypeStruct((n, hid), jnp.float32),
        grid_spec=pltpu.PrefetchScalarGridSpec(
            num_scalar_prefetch=1,
            grid=(n_i, n_k),
            in_specs=[
                pl.BlockSpec((TILE_N, hid), lambda i, k, cnt: (i, 0)),    # h rows
                pl.BlockSpec((TILE_K, hid), lambda i, k, cnt: (k, 0)),    # h cols
                pl.BlockSpec((nheads, 2, fph), lambda i, k, cnt: (0, 0, 0)),
                pl.BlockSpec((TILE_N, TILE_K), lambda i, k, cnt: (i, k)), # adj tile
            ],
            out_specs=pl.BlockSpec((TILE_N, hid), lambda i, k, cnt: (i, 0)),
            scratch_shapes=[
                pltpu.VMEM((TILE_N, hid), jnp.float32),     # acc
                pltpu.VMEM((TILE_N, nheads), jnp.float32),  # rowsum
            ],
        ),
        compiler_params=pltpu.CompilerParams(
            dimension_semantics=("parallel", "arbitrary")),
    )(counts, h, h, a_stack, adj_i8)


# ------------------------------ SpGAT forward --------------------------------

def spgat_forward(x, adj, head_params, out_W, out_a, *, alpha):
    """SpGAT.forward (eval mode: dropouts are identity)."""
    N, nfeat = x.shape
    nheads = len(head_params)
    nhid = head_params[0][0].shape[1]
    nclass = out_W.shape[1]

    # Pad the graph to the tile boundary; padded rows/cols have adj == 0 and
    # are masked out, padded rows are sliced off at the end.
    n_pad = _round_up(max(N, TILE_N), TILE_N)
    x_p = jnp.zeros((n_pad, nfeat), jnp.float32).at[:N, :].set(x)
    adj_p = jnp.zeros((n_pad, n_pad), jnp.int8).at[:N, :N].set(
        (adj != 0).astype(jnp.int8))                         # int8 adj: 1/4 HBM

    # ---- hidden layer: all heads fused into one projection + one attention --
    w_cat = jnp.concatenate([W for (W, _) in head_params], axis=1)  # (nfeat, H)
    a_stack = jnp.stack([a for (_, a) in head_params], axis=0)      # (nheads,2,nhid)
    h_cat = project(x_p, w_cat)                                     # (n_pad, H)
    hidden = sp_attention(h_cat, adj_p, a_stack,
                          nheads=nheads, fph=nhid, alpha=alpha,
                          final=False, valid_cols=0)                # (n_pad, H)

    # ---- output layer: pad nclass to 128 lanes for dense stores -------------
    PAD = 128
    out_W_p = jnp.zeros((nheads * nhid, PAD), jnp.float32).at[:, :nclass].set(out_W)
    out_a_p = jnp.zeros((1, 2, PAD), jnp.float32).at[0, :, :nclass].set(out_a)
    h2 = project(hidden, out_W_p)                                   # (n_pad, 128)
    logp = sp_attention(h2, adj_p, out_a_p,
                        nheads=1, fph=PAD, alpha=alpha,
                        final=True, valid_cols=nclass)              # (n_pad, 128)
    return logp[:N, :nclass]


def init_params(key, nfeat, nhid, nclass, nheads):
    """Deterministic Xavier-normal-ish init (matches pyGAT parameter shapes)."""
    keys = jax.random.split(key, 2 * nheads + 2)

    def xavier(k, shape):
        std = jnp.sqrt(2.0 / (shape[0] + shape[1])).astype(jnp.float32)
        return std * jax.random.normal(k, shape, dtype=jnp.float32)

    head_params = []
    for i in range(nheads):
        W = xavier(keys[2 * i], (nfeat, nhid))
        # pyGAT: a has shape (1, 2*nhid); stored here as (2, nhid)
        a = xavier(keys[2 * i + 1], (2, nhid))
        head_params.append((W, a))
    out_W = xavier(keys[-2], (nhid * nheads, nclass))
    out_a = xavier(keys[-1], (2, nclass))
    return head_params, out_W, out_a


if __name__ == "__main__":
    N, nfeat, nhid, nclass, nheads = 16, 16, 8, 4, 4
    dropout, alpha = 0.6, 0.2  # dropout unused (eval mode)

    key = jax.random.PRNGKey(0)
    kx, ka, kp = jax.random.split(key, 3)

    x = jax.random.normal(kx, (N, nfeat), dtype=jnp.float32)
    adj = (jax.random.uniform(ka, (N, N)) < 0.3).astype(jnp.float32)
    adj = jnp.maximum(adj, jnp.eye(N, dtype=jnp.float32))  # self-loops

    head_params, out_W, out_a = init_params(kp, nfeat, nhid, nclass, nheads)

    out = spgat_forward(x, adj, head_params, out_W, out_a, alpha=alpha)
    out = jax.block_until_ready(out)

    assert out.shape == (N, nclass)
    assert bool(jnp.all(jnp.isfinite(out)))
    # log_softmax rows should (approximately) sum to 1 in prob space
    assert bool(jnp.all(jnp.abs(jnp.sum(jnp.exp(out), axis=1) - 1.0) < 1e-3))
    print("KERNEL_OK")
</pallas_src>

<mosaic_0001>
module attributes {stable_mosaic.version = 11 : i64} {
  func.func @_proj_kernel(%arg0: i32, %arg1: memref<128x16xf32, #tpu.memory_space<vmem>>, %arg2: memref<16x32xf32, #tpu.memory_space<vmem>>, %arg3: memref<128x32xf32, #tpu.memory_space<vmem>>) attributes {dimension_semantics = [#tpu.dimension_semantics<parallel>], iteration_bounds = array<i64: 1>, scalar_prefetch = 0 : i64, scratch_operands = 0 : i64, tpu.core_type = #tpu.core_type<tc>, window_params = [{transform_indices = @transform_0, window_bounds = array<i64: 128, 16>}, {pipeline_mode = #tpu.pipeline_mode<synchronous>, transform_indices = @transform_1, window_bounds = array<i64: 16, 32>}, {transform_indices = @transform_2, window_bounds = array<i64: 128, 32>}]} {
    %c0 = arith.constant 0 : index
    %c0_0 = arith.constant 0 : index
    %0 = vector.load %arg1[%c0, %c0_0] : memref<128x16xf32, #tpu.memory_space<vmem>>, vector<128x16xf32>
    %c0_1 = arith.constant 0 : index
    %c0_2 = arith.constant 0 : index
    %1 = vector.load %arg2[%c0_1, %c0_2] : memref<16x32xf32, #tpu.memory_space<vmem>>, vector<16x32xf32>
    %cst = arith.constant dense<0.000000e+00> : vector<128x32xf32>
    %2 = tpu.matmul %0, %1, %cst {dimension_numbers = #tpu.dot_dimension_numbers<[1], [0], [0], [1], [0, 0, 1, 1], [], []>} : vector<128x16xf32>, vector<16x32xf32>, vector<128x32xf32> -> vector<128x32xf32>
    %c0_3 = arith.constant 0 : index
    %c0_4 = arith.constant 0 : index
    %3 = vector.load %arg3[%c0_3, %c0_4] : memref<128x32xf32, #tpu.memory_space<vmem>>, vector<128x32xf32>
    tpu.vector_store %arg3[%c0_3, %c0_4], %2 {strides = array<i32>} : memref<128x32xf32, #tpu.memory_space<vmem>>, vector<128x32xf32>,
    return
  }
  func.func @transform_0(%arg0: i32) -> (i32, i32) {
    %c0_i32 = arith.constant 0 : i32
    %c0_i32_0 = arith.constant 0 : i32
    return %arg0, %c0_i32 : i32, i32
  }
  func.func @transform_1(%arg0: i32) -> (i32, i32) {
    %c0_i32 = arith.constant 0 : i32
    %c0_i32_0 = arith.constant 0 : i32
    %c0_i32_1 = arith.constant 0 : i32
    return %c0_i32, %c0_i32_0 : i32, i32
  }
  func.func @transform_2(%arg0: i32) -> (i32, i32) {
    %c0_i32 = arith.constant 0 : i32
    %c0_i32_0 = arith.constant 0 : i32
    return %arg0, %c0_i32 : i32, i32
  }
}

</mosaic_0001>

<llo_original>
// kernel: tpu_custom_call.1
$region0: #{tpu_custom_call.1}
  #allocation0 [shape = 'u32[]', space=smem, size = 0x4, offset = 0x4, fixed_abs, tag = 'smem constant byte address 0x4 - core index']
  #allocation1 [shape = 'u32[144,128]{1,0:T(1,128)}', space=vmem, size = 0x12000, scoped, tag = 'internal scratch']
  %s0 = inlined_call_operand.vmem [shape: f32[128,16], index: 0, kind: input, shape index: {}]
  %s1 = inlined_call_operand.vmem [shape: f32[16,32], index: 1, kind: input, shape index: {}]
  %s2 = inlined_call_operand.vmem [shape: f32[128,32], index: 2, kind: output, shape index: {}]
  %s3 = sld [smem:[#allocation0]]
  $region18: #{tpu_custom_call.1} parent=0
    _
  %s5 = ssub.s32 1, %s3
  %s6 = scalar_select 0, %s5, %s3
  // Predicated region
  $region2: #{tpu_custom_call.1} parent=0 // pred_check
    _
  $region3: #{tpu_custom_call.1} parent=0 // pred_check_branch
    %8 = sbr.rel (0) target = $region5
  $region4: #{tpu_custom_call.1} parent=0 // pred_region
    _
  $region5: #{tpu_custom_call.1} parent=0 // pred_fallthru
    _
  // Predicated region
  $region6: #{tpu_custom_call.1} parent=0 // pred_check
    _
  $region7: #{tpu_custom_call.1} parent=0 // pred_check_branch
    %10 = sbr.rel (0) target = $region9
  $region8: #{tpu_custom_call.1} parent=0 // pred_region
    _
  $region9: #{tpu_custom_call.1} parent=0 // pred_fallthru
    _
  %v11 = vld [vmem:[%s0] sm:$0xff]
  %v12 = vld [vmem:[%s0 + $0x8] sm:$0xff]
  %v13 = vld [vmem:[%s0 + $0x10] sm:$0xff]
  %v14 = vld [vmem:[%s0 + $0x18] sm:$0xff]
  %v15 = vld [vmem:[%s0 + $0x20] sm:$0xff]
  %v16 = vld [vmem:[%s0 + $0x28] sm:$0xff]
  %v17 = vld [vmem:[%s0 + $0x30] sm:$0xff]
  %v18 = vld [vmem:[%s0 + $0x38] sm:$0xff]
  %v19 = vld [vmem:[%s0 + $0x40] sm:$0xff]
  %v20 = vld [vmem:[%s0 + $0x48] sm:$0xff]
  %v21 = vld [vmem:[%s0 + $0x50] sm:$0xff]
  %v22 = vld [vmem:[%s0 + $0x58] sm:$0xff]
  %v23 = vld [vmem:[%s0 + $0x60] sm:$0xff]
  %v24 = vld [vmem:[%s0 + $0x68] sm:$0xff]
  %v25 = vld [vmem:[%s0 + $0x70] sm:$0xff]
  %v26 = vld [vmem:[%s0 + $0x78] sm:$0xff]
  %v27 = vld [vmem:[%s1] sm:$0xff]
  %v28 = vld [vmem:[%s1 + $0x8] sm:$0xff]
  %vm29 = vcmask 130048
  %v31 = vsel %vm29, %v11, 0
  %v34 = vsel %vm29, %v12, 0
  %v37 = vsel %vm29, %v13, 0
  %v40 = vsel %vm29, %v14, 0
  %v43 = vsel %vm29, %v15, 0
  %v46 = vsel %vm29, %v16, 0
  %v49 = vsel %vm29, %v17, 0
  %v52 = vsel %vm29, %v18, 0
  %v55 = vsel %vm29, %v19, 0
  %v58 = vsel %vm29, %v20, 0
  %v61 = vsel %vm29, %v21, 0
  %v64 = vsel %vm29, %v22, 0
  %v67 = vsel %vm29, %v23, 0
  %v70 = vsel %vm29, %v24, 0
  %v73 = vsel %vm29, %v25, 0
  %v76 = vsel %vm29, %v26, 0
  %78 = vmatprep.subr.mxu0 0.0
  %79 = vmatpush1.msra.mxu0 %v27
  %80 = vmatprep.subr.mxu0 0.0
  %81 = vmatpush1.msra.mxu0 %v28
  %82 = vmatprep.subr.mxu0 0.0
  %83 = vmatpush1.msra.mxu0 0.0
  %84 = vmatprep.subr.mxu0 0.0
  %85 = vmatpush1.msra.mxu0 0.0
  %86 = vmatprep.subr.mxu0 0.0
  %87 = vmatpush1.msra.mxu0 0.0
  %88 = vmatprep.subr.mxu0 0.0
  %89 = vmatpush1.msra.mxu0 0.0
  %90 = vmatprep.subr.mxu0 0.0
  %91 = vmatpush1.msra.mxu0 0.0
  %92 = vmatprep.subr.mxu0 0.0
  %93 = vmatpush1.msra.mxu0 0.0
  %94 = vmatprep.subr.mxu0 0.0
  %95 = vmatpush1.msra.mxu0 0.0
  %96 = vmatprep.subr.mxu0 0.0
  %97 = vmatpush1.msra.mxu0 0.0
  %98 = vmatprep.subr.mxu0 0.0
  %99 = vmatpush1.msra.mxu0 0.0
  %100 = vmatprep.subr.mxu0 0.0
  %101 = vmatpush1.msra.mxu0 0.0
  %102 = vmatprep.subr.mxu0 0.0
  %103 = vmatpush1.msra.mxu0 0.0
  %104 = vmatprep.subr.mxu0 0.0
  %105 = vmatpush1.msra.mxu0 0.0
  %106 = vmatprep.subr.mxu0 0.0
  %107 = vmatpush1.msra.mxu0 0.0
  %108 = vmatprep.subr.mxu0 0.0
  %109 = vmatpush1.msra.mxu0 0.0
  %110 = vmatprep.subr.mxu0 0.0
  %111 = vmatpush1.msra.mxu0 0.0
  %112 = vmatprep.subr.mxu0 0.0
  %113 = vmatpush1.msra.mxu0 0.0
  %114 = vmatprep.subr.mxu0 0.0
  %115 = vmatpush1.msra.mxu0 0.0
  %116 = vmatprep.subr.mxu0 0.0
  %117 = vmatpush1.msra.mxu0 0.0
  %118 = vmatprep.subr.mxu0 0.0
  %119 = vmatpush1.msra.mxu0 0.0
  %120 = vmatprep.subr.mxu0 0.0
  %121 = vmatpush1.msra.mxu0 0.0
  %122 = vmatprep.subr.mxu0 0.0
  %123 = vmatpush1.msra.mxu0 0.0
  %124 = vmatprep.subr.mxu0 0.0
  %125 = vmatpush1.msra.mxu0 0.0
  %126 = vmatprep.subr.mxu0 0.0
  %127 = vmatpush1.msra.mxu0 0.0
  %128 = vmatprep.subr.mxu0 0.0
  %129 = vmatpush1.msra.mxu0 0.0
  %130 = vmatprep.subr.mxu0 0.0
  %131 = vmatpush1.msra.mxu0 0.0
  %132 = vmatprep.subr.mxu0 0.0
  %133 = vmatpush1.msra.mxu0 0.0
  %134 = vmatprep.subr.mxu0 0.0
  %135 = vmatpush1.msra.mxu0 0.0
  %136 = vmatprep.subr.mxu0 0.0
  %137 = vmatpush1.msra.mxu0 0.0
  %138 = vmatprep.subr.mxu0 0.0
  %139 = vmatpush1.msra.mxu0 0.0
  %140 = vmatprep.subr.mxu0 0.0
  %141 = vmatpush1.msra.mxu0 0.0
  %142 = vmatprep.mubr.f32.mxu0 0.0
  %143 = vmatmul.mubr.f32.gmra.mrb[0].mxu0 %v31
  %v144 = vpop.f32.mrb[0].mxu0
  %v145 = vadd.f32 0.0, %v144
  %v146 = vpop.f32.mrb[0].mxu0
  %147 = vmatprep.mubr.f32.mxu0 0.0
  %148 = vmatmul.mubr.f32.gmra.mrb[0].mxu0 %v34
  %v149 = vpop.f32.mrb[0].mxu0
  %v150 = vadd.f32 0.0, %v149
  %v151 = vpop.f32.mrb[0].mxu0
  %152 = vmatprep.mubr.f32.mxu0 0.0
  %153 = vmatmul.mubr.f32.gmra.mrb[0].mxu0 %v37
  %v154 = vpop.f32.mrb[0].mxu0
  %v155 = vadd.f32 0.0, %v154
  %v156 = vpop.f32.mrb[0].mxu0
  %157 = vmatprep.mubr.f32.mxu0 0.0
  %158 = vmatmul.mubr.f32.gmra.mrb[0].mxu0 %v40
  %v159 = vpop.f32.mrb[0].mxu0
  %v160 = vadd.f32 0.0, %v159
  %v161 = vpop.f32.mrb[0].mxu0
  %162 = vmatprep.mubr.f32.mxu0 0.0
  %163 = vmatmul.mubr.f32.gmra.mrb[0].mxu0 %v43
  %v164 = vpop.f32.mrb[0].mxu0
  %v165 = vadd.f32 0.0, %v164
  %v166 = vpop.f32.mrb[0].mxu0
  %167 = vmatprep.mubr.f32.mxu0 0.0
  %168 = vmatmul.mubr.f32.gmra.mrb[0].mxu0 %v46
  %v169 = vpop.f32.mrb[0].mxu0
  %v170 = vadd.f32 0.0, %v169
  %v171 = vpop.f32.mrb[0].mxu0
  %172 = vmatprep.mubr.f32.mxu0 0.0
  %173 = vmatmul.mubr.f32.gmra.mrb[0].mxu0 %v49
  %v174 = vpop.f32.mrb[0].mxu0
  %v175 = vadd.f32 0.0, %v174
  %v176 = vpop.f32.mrb[0].mxu0
  %177 = vmatprep.mubr.f32.mxu0 0.0
  %178 = vmatmul.mubr.f32.gmra.mrb[0].mxu0 %v52
  %v179 = vpop.f32.mrb[0].mxu0
  %v180 = vadd.f32 0.0, %v179
  %v181 = vpop.f32.mrb[0].mxu0
  %182 = vmatprep.mubr.f32.mxu0 0.0
  %183 = vmatmul.mubr.f32.gmra.mrb[0].mxu0 %v55
  %v184 = vpop.f32.mrb[0].mxu0
  %v185 = vadd.f32 0.0, %v184
  %v186 = vpop.f32.mrb[0].mxu0
  %187 = vmatprep.mubr.f32.mxu0 0.0
  %188 = vmatmul.mubr.f32.gmra.mrb[0].mxu0 %v58
  %v189 = vpop.f32.mrb[0].mxu0
  %v190 = vadd.f32 0.0, %v189
  %v191 = vpop.f32.mrb[0].mxu0
  %192 = vmatprep.mubr.f32.mxu0 0.0
  %193 = vmatmul.mubr.f32.gmra.mrb[0].mxu0 %v61
  %v194 = vpop.f32.mrb[0].mxu0
  %v195 = vadd.f32 0.0, %v194
  %v196 = vpop.f32.mrb[0].mxu0
  %197 = vmatprep.mubr.f32.mxu0 0.0
  %198 = vmatmul.mubr.f32.gmra.mrb[0].mxu0 %v64
  %v199 = vpop.f32.mrb[0].mxu0
  %v200 = vadd.f32 0.0, %v199
  %v201 = vpop.f32.mrb[0].mxu0
  %202 = vmatprep.mubr.f32.mxu0 0.0
  %203 = vmatmul.mubr.f32.gmra.mrb[0].mxu0 %v67
  %v204 = vpop.f32.mrb[0].mxu0
  %v205 = vadd.f32 0.0, %v204
  %v206 = vpop.f32.mrb[0].mxu0
  %207 = vmatprep.mubr.f32.mxu0 0.0
  %208 = vmatmul.mubr.f32.gmra.mrb[0].mxu0 %v70
  %v209 = vpop.f32.mrb[0].mxu0
  %v210 = vadd.f32 0.0, %v209
  %v211 = vpop.f32.mrb[0].mxu0
  %212 = vmatprep.mubr.f32.mxu0 0.0
  %213 = vmatmul.mubr.f32.gmra.mrb[0].mxu0 %v73
  %v214 = vpop.f32.mrb[0].mxu0
  %v215 = vadd.f32 0.0, %v214
  %v216 = vpop.f32.mrb[0].mxu0
  %217 = vmatprep.mubr.f32.mxu0 0.0
  %218 = vmatmul.mubr.f32.gmra.mrb[0].mxu0 %v76
  %v219 = vpop.f32.mrb[0].mxu0
  %v220 = vadd.f32 0.0, %v219
  %v221 = vpop.f32.mrb[0].mxu0
  %222 = vdwg.mxu0
  %vm223 = vcmask 261120
  %224 = vst.msk [vmem:[%s2] sm:$0xff] %vm223, %v145
  %225 = vst.msk [vmem:[%s2 + $0x8] sm:$0xff] %vm223, %v150
  %226 = vst.msk [vmem:[%s2 + $0x10] sm:$0xff] %vm223, %v155
  %227 = vst.msk [vmem:[%s2 + $0x18] sm:$0xff] %vm223, %v160
  %228 = vst.msk [vmem:[%s2 + $0x20] sm:$0xff] %vm223, %v165
  %229 = vst.msk [vmem:[%s2 + $0x28] sm:$0xff] %vm223, %v170
  %230 = vst.msk [vmem:[%s2 + $0x30] sm:$0xff] %vm223, %v175
  %231 = vst.msk [vmem:[%s2 + $0x38] sm:$0xff] %vm223, %v180
  %232 = vst.msk [vmem:[%s2 + $0x40] sm:$0xff] %vm223, %v185
  %233 = vst.msk [vmem:[%s2 + $0x48] sm:$0xff] %vm223, %v190
  %234 = vst.msk [vmem:[%s2 + $0x50] sm:$0xff] %vm223, %v195
  %235 = vst.msk [vmem:[%s2 + $0x58] sm:$0xff] %vm223, %v200
  %236 = vst.msk [vmem:[%s2 + $0x60] sm:$0xff] %vm223, %v205
  %237 = vst.msk [vmem:[%s2 + $0x68] sm:$0xff] %vm223, %v210
  %238 = vst.msk [vmem:[%s2 + $0x70] sm:$0xff] %vm223, %v215
  %239 = vst.msk [vmem:[%s2 + $0x78] sm:$0xff] %vm223, %v220
  // Predicated region
  $region10: #{tpu_custom_call.1} parent=0 // pred_check
    _
  $region11: #{tpu_custom_call.1} parent=0 // pred_check_branch
    %241 = sbr.rel (0) target = $region13
  $region12: #{tpu_custom_call.1} parent=0 // pred_region
    _
  $region13: #{tpu_custom_call.1} parent=0 // pred_fallthru
    _
  // Predicated region
  $region14: #{tpu_custom_call.1} parent=0 // pred_check
    _
  $region15: #{tpu_custom_call.1} parent=0 // pred_check_branch
    %243 = sbr.rel (0) target = $region17
  $region16: #{tpu_custom_call.1} parent=0 // pred_region
    _
  $region17: #{tpu_custom_call.1} parent=0 // pred_fallthru
    _

</llo_original>
